<compile_context>
chip_gen: v7x
topology: tpu7x:2x2x1
jax: 0.10.0
libtpu: 0.0.40
codegen_flags: <defaults>
</compile_context>

<pallas_src>
import math

import jax
import jax.numpy as jnp
from jax.experimental import pallas as pl
from jax.experimental.pallas import tpu as pltpu


def _round_up(x, m):
    return ((x + m - 1) // m) * m


def _make_mlp_softmax_kernel(num_linear, approx_recip=False):
    """Fused kernel: `num_linear` Linear layers + ReLUs + softmax.

    The input block arrives batch-major (batch_tile, in_features); it is
    transposed in-kernel (XLU) so all activations are feature-major
    (features, batch_tile) with the batch on the 128-lane axis.
    """

    def kernel(x_ref, *refs):
        # refs = (w0, b0, w1, b1, ..., w_{L-1}, b_{L-1}, out_ref)
        out_ref = refs[-1]
        params = refs[:-1]

        # Native-layout load, in-kernel transpose (XLU slot, otherwise idle).
        h = x_ref[...].T                              # (in_features, batch_tile) f32

        for i in range(num_linear):
            w = params[2 * i][...]                    # (out_features, in_features)
            b = params[2 * i + 1][...]                # (out_features, 1)
            # MXU matmul, f32 accumulation; result tile is lane-dense.
            h = jnp.dot(w, h, preferred_element_type=jnp.float32) + b
            if i < num_linear - 1:                    # ReLU on hidden layers only
                h = jnp.maximum(h, 0.0)

        # Numerically stable softmax over the feature axis (axis 0, sublanes).
        m = jnp.max(h, axis=0, keepdims=True)         # (1, batch_tile)
        e = jnp.exp(h - m)
        s = jnp.sum(e, axis=0, keepdims=True)
        inv = pl.reciprocal(s, approx=approx_recip)   # exact by default (1e-5 tol)
        out_ref[...] = (e * inv).astype(out_ref.dtype)

    return kernel


def _choose_batch_tile(B):
    """Pick a batch tile: full batch for small B; for large B, ~4K-lane tiles
    balanced across >= 2 grid steps (v7x megacore) and 128-lane aligned."""
    if B <= 512:
        return B                                   # single block == full dim
    target = 4096                                  # per-step payload ~0.25-0.5 MB
    n_split = max(2, pl.cdiv(B, target))           # >= 2 so v7x's 2nd TC engages
    return _round_up(pl.cdiv(B, n_split), 128)


def task_policy_net_forward(x, weights, biases, *, batch_tile=None,
                            approx_recip=False, feature_major_output=False):
    """Fused TaskPolicyNet forward pass.

    x:       (B, input_size_1) float32
    weights: list of (out_features, in_features) float32 arrays (PyTorch layout)
    biases:  list of (out_features,) or (out_features, 1) float32 arrays
    returns: (B, output_size_1) softmax probabilities (or (output_size_1, B)
             when feature_major_output=True, skipping the final transpose).
    """
    num_linear = len(weights)
    assert len(biases) == num_linear
    B, in_dim = x.shape
    out_dim = weights[-1].shape[0]

    if batch_tile is None:
        batch_tile = _choose_batch_tile(B)
    n_tiles = pl.cdiv(B, batch_tile)
    if n_tiles > 1:
        assert batch_tile % 128 == 0, (
            "interior batch tiles must be a multiple of 128 (lane axis)")
    b_pad = n_tiles * batch_tile

    # x stays in its native (batch, in_dim) layout; pad only if the balanced
    # tile does not divide B (at most one extra small pass over x).
    x_in = x if b_pad == B else jnp.pad(x, ((0, b_pad - B), (0, 0)))

    # Interleave params as (w0, b0, w1, b1, ...); biases as (out, 1) columns.
    flat_params = []
    for w, b in zip(weights, biases):
        flat_params.append(w)
        flat_params.append(b.reshape(-1, 1))

    # Input read in native row-major layout; params resident via constant maps.
    in_specs = [pl.BlockSpec((batch_tile, in_dim), lambda i: (i, 0))]
    for p in flat_params:
        in_specs.append(pl.BlockSpec(p.shape, lambda i: (0, 0)))

    # Lane-dense output block: last dim is the batch tile.
    out_specs = pl.BlockSpec((out_dim, batch_tile), lambda i: (0, i))

    # Advisory cost estimate so XLA can overlap the custom call.
    param_bytes = sum(int(p.size) * p.dtype.itemsize for p in flat_params)
    flops = sum(2 * w.shape[0] * w.shape[1] * b_pad for w in weights)
    cost = pl.CostEstimate(
        flops=flops,
        transcendentals=out_dim * b_pad,
        bytes_accessed=(x_in.size + out_dim * b_pad) * 4 + param_bytes,
    )

    kernel = _make_mlp_softmax_kernel(num_linear, approx_recip=approx_recip)

    out_t = pl.pallas_call(
        kernel,
        out_shape=jax.ShapeDtypeStruct((out_dim, b_pad), jnp.float32),
        grid=(n_tiles,),
        in_specs=in_specs,
        out_specs=out_specs,
        compiler_params=pltpu.CompilerParams(
            dimension_semantics=("parallel",)),
        cost_estimate=cost,
    )(x_in, *flat_params)

    out_t = out_t[:, :B]
    if feature_major_output:
        return out_t                               # (out_dim, B), no extra pass
    return out_t.T                                 # module-native (B, out_dim)


def init_task_policy_params(key, input_size_1, hidden_size, hidden_layer_1,
                            output_size_1):
    """Init mirroring PyTorch nn.Linear defaults: U(-1/sqrt(fan_in), 1/sqrt(fan_in)).

    Weights stay in the native PyTorch (out_features, in_features) layout;
    biases are (out_features, 1).
    """
    dims = [input_size_1] + [hidden_size] * hidden_layer_1 + [output_size_1]
    weights, biases = [], []
    for i in range(len(dims) - 1):
        fan_in, fan_out = dims[i], dims[i + 1]
        bound = 1.0 / math.sqrt(fan_in)
        key, kw, kb = jax.random.split(key, 3)
        w = jax.random.uniform(kw, (fan_out, fan_in), jnp.float32, -bound, bound)
        b = jax.random.uniform(kb, (fan_out, 1), jnp.float32, -bound, bound)
        weights.append(w)
        biases.append(b)
    return weights, biases


def reference_forward(x, weights, biases):
    """Pure-JAX reference matching the PyTorch forward (batch-major)."""
    h = x
    n = len(weights)
    for i, (w, b) in enumerate(zip(weights, biases)):
        h = h @ w.T + b[:, 0]
        if i < n - 1:
            h = jnp.maximum(h, 0.0)
    return jax.nn.softmax(h, axis=-1)


if __name__ == "__main__":
    # Small shapes consistent with the module's constructor.
    input_size_1 = 16
    hidden_size = 32
    hidden_layer_1 = 3          # -> 3 hidden Linear+ReLU pairs, 4 Linears total
    output_size_1 = 8
    batch = 8

    key = jax.random.PRNGKey(0)
    key, kx = jax.random.split(key)
    x = jax.random.normal(kx, (batch, input_size_1), dtype=jnp.float32)

    weights, biases = init_task_policy_params(
        key, input_size_1, hidden_size, hidden_layer_1, output_size_1)

    out = jax.block_until_ready(task_policy_net_forward(x, weights, biases))
    ref = jax.block_until_ready(reference_forward(x, weights, biases))
    assert out.shape == (batch, output_size_1)
    assert jnp.allclose(out, ref, atol=1e-5, rtol=1e-5), "mismatch vs reference"
    assert jnp.allclose(jnp.sum(out, axis=-1), 1.0, atol=1e-5), "rows must sum to 1"

    # Exercise the auto-tiled multi-step path (grid >= 2, lane-aligned tiles,
    # non-multiple batch so the minimal-padding branch runs too).
    key, kx2 = jax.random.split(key)
    big_batch = 1000
    x_big = jax.random.normal(kx2, (big_batch, input_size_1), dtype=jnp.float32)
    out_big = jax.block_until_ready(task_policy_net_forward(x_big, weights, biases))
    ref_big = jax.block_until_ready(reference_forward(x_big, weights, biases))
    assert out_big.shape == (big_batch, output_size_1)
    assert jnp.allclose(out_big, ref_big, atol=1e-5, rtol=1e-5), "tiled mismatch"

    # Feature-major fast path (skips the call-site transpose entirely).
    out_fm = jax.block_until_ready(
        task_policy_net_forward(x_big, weights, biases, feature_major_output=True))
    assert out_fm.shape == (output_size_1, big_batch)
    assert jnp.allclose(out_fm.T, ref_big, atol=1e-5, rtol=1e-5), "feature-major mismatch"

    print("KERNEL_OK")
</pallas_src>

<mosaic_0001>
module attributes {stable_mosaic.version = 11 : i64} {
  func.func @kernel(%arg0: i32, %arg1: memref<8x16xf32, #tpu.memory_space<vmem>>, %arg2: memref<32x16xf32, #tpu.memory_space<vmem>>, %arg3: memref<32x1xf32, #tpu.memory_space<vmem>>, %arg4: memref<32x32xf32, #tpu.memory_space<vmem>>, %arg5: memref<32x1xf32, #tpu.memory_space<vmem>>, %arg6: memref<32x32xf32, #tpu.memory_space<vmem>>, %arg7: memref<32x1xf32, #tpu.memory_space<vmem>>, %arg8: memref<8x32xf32, #tpu.memory_space<vmem>>, %arg9: memref<8x1xf32, #tpu.memory_space<vmem>>, %arg10: memref<8x8xf32, #tpu.memory_space<vmem>>) attributes {dimension_semantics = [#tpu.dimension_semantics<parallel>], iteration_bounds = array<i64: 1>, scalar_prefetch = 0 : i64, scratch_operands = 0 : i64, tpu.core_type = #tpu.core_type<tc>, window_params = [{transform_indices = @transform_0, window_bounds = array<i64: 8, 16>}, {pipeline_mode = #tpu.pipeline_mode<synchronous>, transform_indices = @transform_1, window_bounds = array<i64: 32, 16>}, {pipeline_mode = #tpu.pipeline_mode<synchronous>, transform_indices = @transform_2, window_bounds = array<i64: 32, 1>}, {pipeline_mode = #tpu.pipeline_mode<synchronous>, transform_indices = @transform_3, window_bounds = array<i64: 32, 32>}, {pipeline_mode = #tpu.pipeline_mode<synchronous>, transform_indices = @transform_4, window_bounds = array<i64: 32, 1>}, {pipeline_mode = #tpu.pipeline_mode<synchronous>, transform_indices = @transform_5, window_bounds = array<i64: 32, 32>}, {pipeline_mode = #tpu.pipeline_mode<synchronous>, transform_indices = @transform_6, window_bounds = array<i64: 32, 1>}, {pipeline_mode = #tpu.pipeline_mode<synchronous>, transform_indices = @transform_7, window_bounds = array<i64: 8, 32>}, {pipeline_mode = #tpu.pipeline_mode<synchronous>, transform_indices = @transform_8, window_bounds = array<i64: 8, 1>}, {transform_indices = @transform_9, window_bounds = array<i64: 8, 8>}]} {
    %c0 = arith.constant 0 : index
    %c0_0 = arith.constant 0 : index
    %0 = vector.load %arg1[%c0, %c0_0] : memref<8x16xf32, #tpu.memory_space<vmem>>, vector<8x16xf32>
    %1 = tpu.transpose %0, [1, 0] : vector<8x16xf32> -> vector<16x8xf32>
    %c0_1 = arith.constant 0 : index
    %c0_2 = arith.constant 0 : index
    %2 = vector.load %arg2[%c0_1, %c0_2] : memref<32x16xf32, #tpu.memory_space<vmem>>, vector<32x16xf32>
    %c0_3 = arith.constant 0 : index
    %c0_4 = arith.constant 0 : index
    %3 = vector.load %arg3[%c0_3, %c0_4] : memref<32x1xf32, #tpu.memory_space<vmem>>, vector<32x1xf32>
    %cst = arith.constant dense<0.000000e+00> : vector<32x8xf32>
    %4 = tpu.matmul %2, %1, %cst {dimension_numbers = #tpu.dot_dimension_numbers<[1], [0], [0], [1], [0, 0, 1, 1], [], []>} : vector<32x16xf32>, vector<16x8xf32>, vector<32x8xf32> -> vector<32x8xf32>
    %5 = vector.broadcast %3 : vector<32x1xf32> to vector<32x8xf32>
    %6 = arith.addf %4, %5 : vector<32x8xf32>
    %cst_5 = arith.constant 0.000000e+00 : f32
    %7 = vector.broadcast %cst_5 : f32 to vector<32x8xf32>
    %8 = arith.maximumf %6, %7 : vector<32x8xf32>
    %c0_6 = arith.constant 0 : index
    %c0_7 = arith.constant 0 : index
    %9 = vector.load %arg4[%c0_6, %c0_7] : memref<32x32xf32, #tpu.memory_space<vmem>>, vector<32x32xf32>
    %c0_8 = arith.constant 0 : index
    %c0_9 = arith.constant 0 : index
    %10 = vector.load %arg5[%c0_8, %c0_9] : memref<32x1xf32, #tpu.memory_space<vmem>>, vector<32x1xf32>
    %cst_10 = arith.constant dense<0.000000e+00> : vector<32x8xf32>
    %11 = tpu.matmul %9, %8, %cst_10 {dimension_numbers = #tpu.dot_dimension_numbers<[1], [0], [0], [1], [0, 0, 1, 1], [], []>} : vector<32x32xf32>, vector<32x8xf32>, vector<32x8xf32> -> vector<32x8xf32>
    %12 = vector.broadcast %10 : vector<32x1xf32> to vector<32x8xf32>
    %13 = arith.addf %11, %12 : vector<32x8xf32>
    %cst_11 = arith.constant 0.000000e+00 : f32
    %14 = vector.broadcast %cst_11 : f32 to vector<32x8xf32>
    %15 = arith.maximumf %13, %14 : vector<32x8xf32>
    %c0_12 = arith.constant 0 : index
    %c0_13 = arith.constant 0 : index
    %16 = vector.load %arg6[%c0_12, %c0_13] : memref<32x32xf32, #tpu.memory_space<vmem>>, vector<32x32xf32>
    %c0_14 = arith.constant 0 : index
    %c0_15 = arith.constant 0 : index
    %17 = vector.load %arg7[%c0_14, %c0_15] : memref<32x1xf32, #tpu.memory_space<vmem>>, vector<32x1xf32>
    %cst_16 = arith.constant dense<0.000000e+00> : vector<32x8xf32>
    %18 = tpu.matmul %16, %15, %cst_16 {dimension_numbers = #tpu.dot_dimension_numbers<[1], [0], [0], [1], [0, 0, 1, 1], [], []>} : vector<32x32xf32>, vector<32x8xf32>, vector<32x8xf32> -> vector<32x8xf32>
    %19 = vector.broadcast %17 : vector<32x1xf32> to vector<32x8xf32>
    %20 = arith.addf %18, %19 : vector<32x8xf32>
    %cst_17 = arith.constant 0.000000e+00 : f32
    %21 = vector.broadcast %cst_17 : f32 to vector<32x8xf32>
    %22 = arith.maximumf %20, %21 : vector<32x8xf32>
    %c0_18 = arith.constant 0 : index
    %c0_19 = arith.constant 0 : index
    %23 = vector.load %arg8[%c0_18, %c0_19] : memref<8x32xf32, #tpu.memory_space<vmem>>, vector<8x32xf32>
    %c0_20 = arith.constant 0 : index
    %c0_21 = arith.constant 0 : index
    %24 = vector.load %arg9[%c0_20, %c0_21] : memref<8x1xf32, #tpu.memory_space<vmem>>, vector<8x1xf32>
    %cst_22 = arith.constant dense<0.000000e+00> : vector<8x8xf32>
    %25 = tpu.matmul %23, %22, %cst_22 {dimension_numbers = #tpu.dot_dimension_numbers<[1], [0], [0], [1], [0, 0, 1, 1], [], []>} : vector<8x32xf32>, vector<32x8xf32>, vector<8x8xf32> -> vector<8x8xf32>
    %26 = vector.broadcast %24 : vector<8x1xf32> to vector<8x8xf32>
    %27 = arith.addf %25, %26 : vector<8x8xf32>
    %cst_23 = arith.constant dense<0xFF800000> : vector<8xf32>
    %28 = vector.multi_reduction <maximumf>, %27, %cst_23 [0] : vector<8x8xf32> to vector<8xf32>
    %29 = vector.shape_cast %28 : vector<8xf32> to vector<1x8xf32>
    %30 = vector.broadcast %29 : vector<1x8xf32> to vector<8x8xf32>
    %31 = arith.subf %27, %30 : vector<8x8xf32>
    %32 = math.exp %31 : vector<8x8xf32>
    %cst_24 = arith.constant dense<0.000000e+00> : vector<8xf32>
    %33 = vector.multi_reduction <add>, %32, %cst_24 [0] : vector<8x8xf32> to vector<8xf32>
    %34 = vector.shape_cast %33 : vector<8xf32> to vector<1x8xf32>
    %35 = tpu.reciprocal %34 : vector<1x8xf32> -> vector<1x8xf32>
    %36 = vector.broadcast %35 : vector<1x8xf32> to vector<8x8xf32>
    %37 = arith.mulf %32, %36 : vector<8x8xf32>
    %c0_25 = arith.constant 0 : index
    %c0_26 = arith.constant 0 : index
    %38 = vector.load %arg10[%c0_25, %c0_26] : memref<8x8xf32, #tpu.memory_space<vmem>>, vector<8x8xf32>
    tpu.vector_store %arg10[%c0_25, %c0_26], %37 {strides = array<i32>} : memref<8x8xf32, #tpu.memory_space<vmem>>, vector<8x8xf32>,
    return
  }
  func.func @transform_0(%arg0: i32) -> (i32, i32) {
    %c0_i32 = arith.constant 0 : i32
    %c0_i32_0 = arith.constant 0 : i32
    return %arg0, %c0_i32 : i32, i32
  }
  func.func @transform_1(%arg0: i32) -> (i32, i32) {
    %c0_i32 = arith.constant 0 : i32
    %c0_i32_0 = arith.constant 0 : i32
    %c0_i32_1 = arith.constant 0 : i32
    return %c0_i32, %c0_i32_0 : i32, i32
  }
  func.func @transform_2(%arg0: i32) -> (i32, i32) {
    %c0_i32 = arith.constant 0 : i32
    %c0_i32_0 = arith.constant 0 : i32
    %c0_i32_1 = arith.constant 0 : i32
    return %c0_i32, %c0_i32_0 : i32, i32
  }
  func.func @transform_3(%arg0: i32) -> (i32, i32) {
    %c0_i32 = arith.constant 0 : i32
    %c0_i32_0 = arith.constant 0 : i32
    %c0_i32_1 = arith.constant 0 : i32
    return %c0_i32, %c0_i32_0 : i32, i32
  }
  func.func @transform_4(%arg0: i32) -> (i32, i32) {
    %c0_i32 = arith.constant 0 : i32
    %c0_i32_0 = arith.constant 0 : i32
    %c0_i32_1 = arith.constant 0 : i32
    return %c0_i32, %c0_i32_0 : i32, i32
  }
  func.func @transform_5(%arg0: i32) -> (i32, i32) {
    %c0_i32 = arith.constant 0 : i32
    %c0_i32_0 = arith.constant 0 : i32
    %c0_i32_1 = arith.constant 0 : i32
    return %c0_i32, %c0_i32_0 : i32, i32
  }
  func.func @transform_6(%arg0: i32) -> (i32, i32) {
    %c0_i32 = arith.constant 0 : i32
    %c0_i32_0 = arith.constant 0 : i32
    %c0_i32_1 = arith.constant 0 : i32
    return %c0_i32, %c0_i32_0 : i32, i32
  }
  func.func @transform_7(%arg0: i32) -> (i32, i32) {
    %c0_i32 = arith.constant 0 : i32
    %c0_i32_0 = arith.constant 0 : i32
    %c0_i32_1 = arith.constant 0 : i32
    return %c0_i32, %c0_i32_0 : i32, i32
  }
  func.func @transform_8(%arg0: i32) -> (i32, i32) {
    %c0_i32 = arith.constant 0 : i32
    %c0_i32_0 = arith.constant 0 : i32
    %c0_i32_1 = arith.constant 0 : i32
    return %c0_i32, %c0_i32_0 : i32, i32
  }
  func.func @transform_9(%arg0: i32) -> (i32, i32) {
    %c0_i32 = arith.constant 0 : i32
    %c0_i32_0 = arith.constant 0 : i32
    return %c0_i32, %arg0 : i32, i32
  }
}

</mosaic_0001>

<llo_original>
// kernel: tpu_custom_call.1
$region0: #{tpu_custom_call.1}
  #allocation0 [shape = 'u32[]', space=smem, size = 0x4, offset = 0x4, fixed_abs, tag = 'smem constant byte address 0x4 - core index']
  #allocation1 [shape = 'u32[144,128]{1,0:T(1,128)}', space=vmem, size = 0x12000, scoped, tag = 'internal scratch']
  %s0 = inlined_call_operand.vmem [shape: f32[8,16], index: 0, kind: input, shape index: {}]
  %s1 = inlined_call_operand.vmem [shape: f32[32,16], index: 1, kind: input, shape index: {}]
  %s2 = inlined_call_operand.vmem [shape: f32[32,1], index: 2, kind: input, shape index: {}]
  %s3 = inlined_call_operand.vmem [shape: f32[32,32], index: 3, kind: input, shape index: {}]
  %s4 = inlined_call_operand.vmem [shape: f32[32,1], index: 4, kind: input, shape index: {}]
  %s5 = inlined_call_operand.vmem [shape: f32[32,32], index: 5, kind: input, shape index: {}]
  %s6 = inlined_call_operand.vmem [shape: f32[32,1], index: 6, kind: input, shape index: {}]
  %s7 = inlined_call_operand.vmem [shape: f32[8,32], index: 7, kind: input, shape index: {}]
  %s8 = inlined_call_operand.vmem [shape: f32[8,1], index: 8, kind: input, shape index: {}]
  %s9 = inlined_call_operand.hbm [shape: f32[8,8], index: 9, kind: output, shape index: {}]
  %s10 = sld [smem:[#allocation0]]
  $region46: #{tpu_custom_call.1} parent=0
    _
  %s12 = ssub.s32 1, %s10
  %s13 = scalar_select 0, %s12, %s10
  $region1: #{tpu_custom_call.1} parent=0
    #allocation2 [shape = 'u8[4096]{0}', space=vmem, size = 0x1000, scoped, tag = 'output window, operand 0, single buffered']
    #allocation3 [shape = 's32[1]{0}', space=sflag, size = 0x4, scoped, tag = 'scoped memory for tpu_custom_call.1']
    %14 = vsyncpa [#allocation3], 0
    // Predicated region
    $region2: #{tpu_custom_call.1} parent=1 // pred_check
      _
    $region3: #{tpu_custom_call.1} parent=1 // pred_check_branch
      %16 = sbr.rel (0) target = $region5
    $region4: #{tpu_custom_call.1} parent=1 // pred_region
      _
    $region5: #{tpu_custom_call.1} parent=1 // pred_fallthru
      _
    // Predicated region
    $region6: #{tpu_custom_call.1} parent=1 // pred_check
      _
    $region7: #{tpu_custom_call.1} parent=1 // pred_check_branch
      %18 = sbr.rel (0) target = $region9
    $region8: #{tpu_custom_call.1} parent=1 // pred_region
      _
    $region9: #{tpu_custom_call.1} parent=1 // pred_fallthru
      _
    // Predicated region
    $region10: #{tpu_custom_call.1} parent=1 // pred_check
      _
    $region11: #{tpu_custom_call.1} parent=1 // pred_check_branch
      %20 = sbr.rel (0) target = $region13
    $region12: #{tpu_custom_call.1} parent=1 // pred_region
      _
    $region13: #{tpu_custom_call.1} parent=1 // pred_fallthru
      _
    // Predicated region
    $region14: #{tpu_custom_call.1} parent=1 // pred_check
      _
    $region15: #{tpu_custom_call.1} parent=1 // pred_check_branch
      %22 = sbr.rel (0) target = $region17
    $region16: #{tpu_custom_call.1} parent=1 // pred_region
      _
    $region17: #{tpu_custom_call.1} parent=1 // pred_fallthru
      _
    // Predicated region
    $region18: #{tpu_custom_call.1} parent=1 // pred_check
      _
    $region19: #{tpu_custom_call.1} parent=1 // pred_check_branch
      %24 = sbr.rel (0) target = $region21
    $region20: #{tpu_custom_call.1} parent=1 // pred_region
      _
    $region21: #{tpu_custom_call.1} parent=1 // pred_fallthru
      _
    // Predicated region
    $region22: #{tpu_custom_call.1} parent=1 // pred_check
      _
    $region23: #{tpu_custom_call.1} parent=1 // pred_check_branch
      %26 = sbr.rel (0) target = $region25
    $region24: #{tpu_custom_call.1} parent=1 // pred_region
      _
    $region25: #{tpu_custom_call.1} parent=1 // pred_fallthru
      _
    // Predicated region
    $region26: #{tpu_custom_call.1} parent=1 // pred_check
      _
    $region27: #{tpu_custom_call.1} parent=1 // pred_check_branch
      %28 = sbr.rel (0) target = $region29
    $region28: #{tpu_custom_call.1} parent=1 // pred_region
      _
    $region29: #{tpu_custom_call.1} parent=1 // pred_fallthru
      _
    // Predicated region
    $region30: #{tpu_custom_call.1} parent=1 // pred_check
      _
    $region31: #{tpu_custom_call.1} parent=1 // pred_check_branch
      %30 = sbr.rel (0) target = $region33
    $region32: #{tpu_custom_call.1} parent=1 // pred_region
      _
    $region33: #{tpu_custom_call.1} parent=1 // pred_fallthru
      _
    // Predicated region
    $region34: #{tpu_custom_call.1} parent=1 // pred_check
      _
    $region35: #{tpu_custom_call.1} parent=1 // pred_check_branch
      %32 = sbr.rel (0) target = $region37
    $region36: #{tpu_custom_call.1} parent=1 // pred_region
      _
    $region37: #{tpu_custom_call.1} parent=1 // pred_fallthru
      _
    %v33 = vld [vmem:[%s0] sm:$0xff]
    %v34 = vld [vmem:[%s1] sm:$0xff]
    %v35 = vld [vmem:[%s1 + $0x8] sm:$0xff]
    %v36 = vld [vmem:[%s1 + $0x10] sm:$0xff]
    %v37 = vld [vmem:[%s1 + $0x18] sm:$0xff]
    %v38 = vld [vmem:[%s2] sm:$0xff]
    %v39 = vld [vmem:[%s2 + $0x8] sm:$0xff]
    %v40 = vld [vmem:[%s2 + $0x10] sm:$0xff]
    %v41 = vld [vmem:[%s2 + $0x18] sm:$0xff]
    %43 = vset.pattern.permute.xlu0 0
    %44 = vperm.xlu0 %43, %v38
    %v45 = vpop.permute.xlu0 %44
    %48 = vset.pattern.permute.xlu0 0
    %49 = vperm.xlu0 %48, %v39
    %v50 = vpop.permute.xlu0 %49
    %53 = vset.pattern.permute.xlu0 0
    %54 = vperm.xlu0 %53, %v40
    %v55 = vpop.permute.xlu0 %54
    %58 = vset.pattern.permute.xlu0 0
    %59 = vperm.xlu0 %58, %v41
    %v60 = vpop.permute.xlu0 %59
    %vm62 = vcmask 130048
    %v64 = vsel %vm62, %v34, 0
    %v67 = vsel %vm62, %v35, 0
    %v70 = vsel %vm62, %v36, 0
    %v73 = vsel %vm62, %v37, 0
    %v76 = vsel %vm62, %v33, 0
    %78 = vmatprep.subr.mxu0 0.0
    %79 = vmatpush1.xpose.msra.mxu0 %v76
    %80 = vmatprep.subr.mxu0 0.0
    %81 = vmatpush1.xpose.msra.mxu0 0.0
    %82 = vmatprep.subr.mxu0 0.0
    %83 = vmatpush1.xpose.msra.mxu0 0.0
    %84 = vmatprep.subr.mxu0 0.0
    %85 = vmatpush1.xpose.msra.mxu0 0.0
    %86 = vmatprep.subr.mxu0 0.0
    %87 = vmatpush1.xpose.msra.mxu0 0.0
    %88 = vmatprep.subr.mxu0 0.0
    %89 = vmatpush1.xpose.msra.mxu0 0.0
    %90 = vmatprep.subr.mxu0 0.0
    %91 = vmatpush1.xpose.msra.mxu0 0.0
    %92 = vmatprep.subr.mxu0 0.0
    %93 = vmatpush1.xpose.msra.mxu0 0.0
    %94 = vmatprep.subr.mxu0 0.0
    %95 = vmatpush1.xpose.msra.mxu0 0.0
    %96 = vmatprep.subr.mxu0 0.0
    %97 = vmatpush1.xpose.msra.mxu0 0.0
    %98 = vmatprep.subr.mxu0 0.0
    %99 = vmatpush1.xpose.msra.mxu0 0.0
    %100 = vmatprep.subr.mxu0 0.0
    %101 = vmatpush1.xpose.msra.mxu0 0.0
    %102 = vmatprep.subr.mxu0 0.0
    %103 = vmatpush1.xpose.msra.mxu0 0.0
    %104 = vmatprep.subr.mxu0 0.0
    %105 = vmatpush1.xpose.msra.mxu0 0.0
    %106 = vmatprep.subr.mxu0 0.0
    %107 = vmatpush1.xpose.msra.mxu0 0.0
    %108 = vmatprep.subr.mxu0 0.0
    %109 = vmatpush1.xpose.msra.mxu0 0.0
    %110 = vmatprep.subr.mxu0 0.0
    %111 = vmatpush1.xpose.msra.mxu0 0.0
    %112 = vmatprep.subr.mxu0 0.0
    %113 = vmatpush1.xpose.msra.mxu0 0.0
    %114 = vmatprep.subr.mxu0 0.0
    %115 = vmatpush1.xpose.msra.mxu0 0.0
    %116 = vmatprep.subr.mxu0 0.0
    %117 = vmatpush1.xpose.msra.mxu0 0.0
    %118 = vmatprep.subr.mxu0 0.0
    %119 = vmatpush1.xpose.msra.mxu0 0.0
    %120 = vmatprep.subr.mxu0 0.0
    %121 = vmatpush1.xpose.msra.mxu0 0.0
    %122 = vmatprep.subr.mxu0 0.0
    %123 = vmatpush1.xpose.msra.mxu0 0.0
    %124 = vmatprep.subr.mxu0 0.0
    %125 = vmatpush1.xpose.msra.mxu0 0.0
    %126 = vmatprep.subr.mxu0 0.0
    %127 = vmatpush1.xpose.msra.mxu0 0.0
    %128 = vmatprep.subr.mxu0 0.0
    %129 = vmatpush1.xpose.msra.mxu0 0.0
    %130 = vmatprep.subr.mxu0 0.0
    %131 = vmatpush1.xpose.msra.mxu0 0.0
    %132 = vmatprep.subr.mxu0 0.0
    %133 = vmatpush1.xpose.msra.mxu0 0.0
    %134 = vmatprep.subr.mxu0 0.0
    %135 = vmatpush1.xpose.msra.mxu0 0.0
    %136 = vmatprep.subr.mxu0 0.0
    %137 = vmatpush1.xpose.msra.mxu0 0.0
    %138 = vmatprep.subr.mxu0 0.0
    %139 = vmatpush1.xpose.msra.mxu0 0.0
    %140 = vmatprep.subr.mxu0 0.0
    %141 = vmatpush1.xpose.msra.mxu0 0.0
    %142 = vmatprep.mubr.f32.mxu0 0.0
    %143 = vmatmul.mubr.f32.gmra.mrb[0].mxu0 %v64
    %v144 = vpop.f32.mrb[0].mxu0
    %v145 = vadd.f32 %v45, %v144
    %v146 = vpop.f32.mrb[0].mxu0
    %147 = vmatprep.mubr.f32.mxu0 0.0
    %148 = vmatmul.mubr.f32.gmra.mrb[0].mxu0 %v67
    %v149 = vpop.f32.mrb[0].mxu0
    %v150 = vadd.f32 %v50, %v149
    %v151 = vpop.f32.mrb[0].mxu0
    %152 = vmatprep.mubr.f32.mxu0 0.0
    %153 = vmatmul.mubr.f32.gmra.mrb[0].mxu0 %v70
    %v154 = vpop.f32.mrb[0].mxu0
    %v155 = vadd.f32 %v55, %v154
    %v156 = vpop.f32.mrb[0].mxu0
    %157 = vmatprep.mubr.f32.mxu0 0.0
    %158 = vmatmul.mubr.f32.gmra.mrb[0].mxu0 %v73
    %v159 = vpop.f32.mrb[0].mxu0
    %v160 = vadd.f32 %v60, %v159
    %v161 = vpop.f32.mrb[0].mxu0
    %162 = vdwg.mxu0
    %v163 = vmax.f32 %v145, 0.0
    %v164 = vmax.f32 %v150, 0.0
    %v165 = vmax.f32 %v155, 0.0
    %v166 = vmax.f32 %v160, 0.0
    %v167 = vld [vmem:[%s3] sm:$0xff]
    %v168 = vld [vmem:[%s3 + $0x8] sm:$0xff]
    %v169 = vld [vmem:[%s3 + $0x10] sm:$0xff]
    %v170 = vld [vmem:[%s3 + $0x18] sm:$0xff]
    %v171 = vld [vmem:[%s4] sm:$0xff]
    %v172 = vld [vmem:[%s4 + $0x8] sm:$0xff]
    %v173 = vld [vmem:[%s4 + $0x10] sm:$0xff]
    %v174 = vld [vmem:[%s4 + $0x18] sm:$0xff]
    %176 = vset.pattern.permute.xlu0 0
    %177 = vperm.xlu0 %176, %v171
    %v178 = vpop.permute.xlu0 %177
    %181 = vset.pattern.permute.xlu0 0
    %182 = vperm.xlu0 %181, %v172
    %v183 = vpop.permute.xlu0 %182
    %186 = vset.pattern.permute.xlu0 0
    %187 = vperm.xlu0 %186, %v173
    %v188 = vpop.permute.xlu0 %187
    %191 = vset.pattern.permute.xlu0 0
    %192 = vperm.xlu0 %191, %v174
    %v193 = vpop.permute.xlu0 %192
    %vm195 = vcmask 261120
    %v197 = vsel %vm195, %v167, 0
    %v200 = vsel %vm195, %v168, 0
    %v203 = vsel %vm195, %v169, 0
    %v206 = vsel %vm195, %v170, 0
    %208 = vmatprep.subr.mxu0 0.0
    %209 = vmatpush1.msra.mxu0 %v163
    %210 = vmatprep.subr.mxu0 0.0
    %211 = vmatpush1.msra.mxu0 %v164
    %212 = vmatprep.subr.mxu0 0.0
    %213 = vmatpush1.msra.mxu0 %v165
    %214 = vmatprep.subr.mxu0 0.0
    %215 = vmatpush1.msra.mxu0 %v166
    %216 = vmatprep.subr.mxu0 0.0
    %217 = vmatpush1.msra.mxu0 0.0
    %218 = vmatprep.subr.mxu0 0.0
    %219 = vmatpush1.msra.mxu0 0.0
    %220 = vmatprep.subr.mxu0 0.0
    %221 = vmatpush1.msra.mxu0 0.0
    %222 = vmatprep.subr.mxu0 0.0
    %223 = vmatpush1.msra.mxu0 0.0
    %224 = vmatprep.subr.mxu0 0.0
    %225 = vmatpush1.msra.mxu0 0.0
    %226 = vmatprep.subr.mxu0 0.0
    %227 = vmatpush1.msra.mxu0 0.0
    %228 = vmatprep.subr.mxu0 0.0
    %229 = vmatpush1.msra.mxu0 0.0
    %230 = vmatprep.subr.mxu0 0.0
    %231 = vmatpush1.msra.mxu0 0.0
    %232 = vmatprep.subr.mxu0 0.0
    %233 = vmatpush1.msra.mxu0 0.0
    %234 = vmatprep.subr.mxu0 0.0
    %235 = vmatpush1.msra.mxu0 0.0
    %236 = vmatprep.subr.mxu0 0.0
    %237 = vmatpush1.msra.mxu0 0.0
    %238 = vmatprep.subr.mxu0 0.0
    %239 = vmatpush1.msra.mxu0 0.0
    %240 = vmatprep.subr.mxu0 0.0
    %241 = vmatpush1.msra.mxu0 0.0
    %242 = vmatprep.subr.mxu0 0.0
    %243 = vmatpush1.msra.mxu0 0.0
    %244 = vmatprep.subr.mxu0 0.0
    %245 = vmatpush1.msra.mxu0 0.0
    %246 = vmatprep.subr.mxu0 0.0
    %247 = vmatpush1.msra.mxu0 0.0
    %248 = vmatprep.subr.mxu0 0.0
    %249 = vmatpush1.msra.mxu0 0.0
    %250 = vmatprep.subr.mxu0 0.0
    %251 = vmatpush1.msra.mxu0 0.0
    %252 = vmatprep.subr.mxu0 0.0
    %253 = vmatpush1.msra.mxu0 0.0
    %254 = vmatprep.subr.mxu0 0.0
    %255 = vmatpush1.msra.mxu0 0.0
    %256 = vmatprep.subr.mxu0 0.0
    %257 = vmatpush1.msra.mxu0 0.0
    %258 = vmatprep.subr.mxu0 0.0
    %259 = vmatpush1.msra.mxu0 0.0
    %260 = vmatprep.subr.mxu0 0.0
    %261 = vmatpush1.msra.mxu0 0.0
    %262 = vmatprep.subr.mxu0 0.0
    %263 = vmatpush1.msra.mxu0 0.0
    %264 = vmatprep.subr.mxu0 0.0
    %265 = vmatpush1.msra.mxu0 0.0
    %266 = vmatprep.subr.mxu0 0.0
    %267 = vmatpush1.msra.mxu0 0.0
    %268 = vmatprep.subr.mxu0 0.0
    %269 = vmatpush1.msra.mxu0 0.0
    %270 = vmatprep.subr.mxu0 0.0
    %271 = vmatpush1.msra.mxu0 0.0
    %272 = vmatprep.mubr.f32.mxu0 0.0
    %273 = vmatmul.mubr.f32.gmra.mrb[0].mxu0 %v197
    %v274 = vpop.f32.mrb[0].mxu0
    %v275 = vadd.f32 %v178, %v274
    %v276 = vpop.f32.mrb[0].mxu0
    %277 = vmatprep.mubr.f32.mxu0 0.0
    %278 = vmatmul.mubr.f32.gmra.mrb[0].mxu0 %v200
    %v279 = vpop.f32.mrb[0].mxu0
    %v280 = vadd.f32 %v183, %v279
    %v281 = vpop.f32.mrb[0].mxu0
    %282 = vmatprep.mubr.f32.mxu0 0.0
    %283 = vmatmul.mubr.f32.gmra.mrb[0].mxu0 %v203
    %v284 = vpop.f32.mrb[0].mxu0
    %v285 = vadd.f32 %v188, %v284
    %v286 = vpop.f32.mrb[0].mxu0
    %287 = vmatprep.mubr.f32.mxu0 0.0
    %288 = vmatmul.mubr.f32.gmra.mrb[0].mxu0 %v206
    %v289 = vpop.f32.mrb[0].mxu0
    %v290 = vadd.f32 %v193, %v289
    %v291 = vpop.f32.mrb[0].mxu0
    %292 = vdwg.mxu0
    %v293 = vmax.f32 %v275, 0.0
    %v294 = vmax.f32 %v280, 0.0
    %v295 = vmax.f32 %v285, 0.0
    %v296 = vmax.f32 %v290, 0.0
    %v297 = vld [vmem:[%s5] sm:$0xff]
    %v298 = vld [vmem:[%s5 + $0x8] sm:$0xff]
    %v299 = vld [vmem:[%s5 + $0x10] sm:$0xff]
    %v300 = vld [vmem:[%s5 + $0x18] sm:$0xff]
    %v301 = vld [vmem:[%s6] sm:$0xff]
    %v302 = vld [vmem:[%s6 + $0x8] sm:$0xff]
    %v303 = vld [vmem:[%s6 + $0x10] sm:$0xff]
    %v304 = vld [vmem:[%s6 + $0x18] sm:$0xff]
    %306 = vset.pattern.permute.xlu0 0
    %307 = vperm.xlu0 %306, %v301
    %v308 = vpop.permute.xlu0 %307
    %311 = vset.pattern.permute.xlu0 0
    %312 = vperm.xlu0 %311, %v302
    %v313 = vpop.permute.xlu0 %312
    %316 = vset.pattern.permute.xlu0 0
    %317 = vperm.xlu0 %316, %v303
    %v318 = vpop.permute.xlu0 %317
    %321 = vset.pattern.permute.xlu0 0
    %322 = vperm.xlu0 %321, %v304
    %v323 = vpop.permute.xlu0 %322
    %v326 = vsel %vm195, %v297, 0
    %v329 = vsel %vm195, %v298, 0
    %v332 = vsel %vm195, %v299, 0
    %v335 = vsel %vm195, %v300, 0
    %337 = vmatprep.subr.mxu0 0.0
    %338 = vmatpush1.msra.mxu0 %v293
    %339 = vmatprep.subr.mxu0 0.0
    %340 = vmatpush1.msra.mxu0 %v294
    %341 = vmatprep.subr.mxu0 0.0
    %342 = vmatpush1.msra.mxu0 %v295
    %343 = vmatprep.subr.mxu0 0.0
    %344 = vmatpush1.msra.mxu0 %v296
    %345 = vmatprep.subr.mxu0 0.0
    %346 = vmatpush1.msra.mxu0 0.0
    %347 = vmatprep.subr.mxu0 0.0
    %348 = vmatpush1.msra.mxu0 0.0
    %349 = vmatprep.subr.mxu0 0.0
    %350 = vmatpush1.msra.mxu0 0.0
    %351 = vmatprep.subr.mxu0 0.0
    %352 = vmatpush1.msra.mxu0 0.0
    %353 = vmatprep.subr.mxu0 0.0
    %354 = vmatpush1.msra.mxu0 0.0
    %355 = vmatprep.subr.mxu0 0.0
    %356 = vmatpush1.msra.mxu0 0.0
    %357 = vmatprep.subr.mxu0 0.0
    %358 = vmatpush1.msra.mxu0 0.0
    %359 = vmatprep.subr.mxu0 0.0
    %360 = vmatpush1.msra.mxu0 0.0
    %361 = vmatprep.subr.mxu0 0.0
    %362 = vmatpush1.msra.mxu0 0.0
    %363 = vmatprep.subr.mxu0 0.0
    %364 = vmatpush1.msra.mxu0 0.0
    %365 = vmatprep.subr.mxu0 0.0
    %366 = vmatpush1.msra.mxu0 0.0
    %367 = vmatprep.subr.mxu0 0.0
    %368 = vmatpush1.msra.mxu0 0.0
    %369 = vmatprep.subr.mxu0 0.0
    %370 = vmatpush1.msra.mxu0 0.0
    %371 = vmatprep.subr.mxu0 0.0
    %372 = vmatpush1.msra.mxu0 0.0
    %373 = vmatprep.subr.mxu0 0.0
    %374 = vmatpush1.msra.mxu0 0.0
    %375 = vmatprep.subr.mxu0 0.0
    %376 = vmatpush1.msra.mxu0 0.0
    %377 = vmatprep.subr.mxu0 0.0
    %378 = vmatpush1.msra.mxu0 0.0
    %379 = vmatprep.subr.mxu0 0.0
    %380 = vmatpush1.msra.mxu0 0.0
    %381 = vmatprep.subr.mxu0 0.0
    %382 = vmatpush1.msra.mxu0 0.0
    %383 = vmatprep.subr.mxu0 0.0
    %384 = vmatpush1.msra.mxu0 0.0
    %385 = vmatprep.subr.mxu0 0.0
    %386 = vmatpush1.msra.mxu0 0.0
    %387 = vmatprep.subr.mxu0 0.0
    %388 = vmatpush1.msra.mxu0 0.0
    %389 = vmatprep.subr.mxu0 0.0
    %390 = vmatpush1.msra.mxu0 0.0
    %391 = vmatprep.subr.mxu0 0.0
    %392 = vmatpush1.msra.mxu0 0.0
    %393 = vmatprep.subr.mxu0 0.0
    %394 = vmatpush1.msra.mxu0 0.0
    %395 = vmatprep.subr.mxu0 0.0
    %396 = vmatpush1.msra.mxu0 0.0
    %397 = vmatprep.subr.mxu0 0.0
    %398 = vmatpush1.msra.mxu0 0.0
    %399 = vmatprep.subr.mxu0 0.0
    %400 = vmatpush1.msra.mxu0 0.0
    %401 = vmatprep.mubr.f32.mxu0 0.0
    %402 = vmatmul.mubr.f32.gmra.mrb[0].mxu0 %v326
    %v403 = vpop.f32.mrb[0].mxu0
    %v404 = vadd.f32 %v308, %v403
    %v405 = vpop.f32.mrb[0].mxu0
    %406 = vmatprep.mubr.f32.mxu0 0.0
    %407 = vmatmul.mubr.f32.gmra.mrb[0].mxu0 %v329
    %v408 = vpop.f32.mrb[0].mxu0
    %v409 = vadd.f32 %v313, %v408
    %v410 = vpop.f32.mrb[0].mxu0
    %411 = vmatprep.mubr.f32.mxu0 0.0
    %412 = vmatmul.mubr.f32.gmra.mrb[0].mxu0 %v332
    %v413 = vpop.f32.mrb[0].mxu0
    %v414 = vadd.f32 %v318, %v413
    %v415 = vpop.f32.mrb[0].mxu0
    %416 = vmatprep.mubr.f32.mxu0 0.0
    %417 = vmatmul.mubr.f32.gmra.mrb[0].mxu0 %v335
    %v418 = vpop.f32.mrb[0].mxu0
    %v419 = vadd.f32 %v323, %v418
    %v420 = vpop.f32.mrb[0].mxu0
    %421 = vdwg.mxu0
    %v422 = vmax.f32 %v404, 0.0
    %v423 = vmax.f32 %v409, 0.0
    %v424 = vmax.f32 %v414, 0.0
    %v425 = vmax.f32 %v419, 0.0
    %v426 = vld [vmem:[%s7] sm:$0xff]
    %v427 = vld [vmem:[%s8] sm:$0xff]
    %429 = vset.pattern.permute.xlu0 0
    %430 = vperm.xlu0 %429, %v427
    %v431 = vpop.permute.xlu0 %430
    %v434 = vsel %vm195, %v426, 0
    %436 = vmatprep.subr.mxu0 0.0
    %437 = vmatpush1.msra.mxu0 %v422
    %438 = vmatprep.subr.mxu0 0.0
    %439 = vmatpush1.msra.mxu0 %v423
    %440 = vmatprep.subr.mxu0 0.0
    %441 = vmatpush1.msra.mxu0 %v424
    %442 = vmatprep.subr.mxu0 0.0
    %443 = vmatpush1.msra.mxu0 %v425
    %444 = vmatprep.subr.mxu0 0.0
    %445 = vmatpush1.msra.mxu0 0.0
    %446 = vmatprep.subr.mxu0 0.0
    %447 = vmatpush1.msra.mxu0 0.0
    %448 = vmatprep.subr.mxu0 0.0
    %449 = vmatpush1.msra.mxu0 0.0
    %450 = vmatprep.subr.mxu0 0.0
    %451 = vmatpush1.msra.mxu0 0.0
    %452 = vmatprep.subr.mxu0 0.0
    %453 = vmatpush1.msra.mxu0 0.0
    %454 = vmatprep.subr.mxu0 0.0
    %455 = vmatpush1.msra.mxu0 0.0
    %456 = vmatprep.subr.mxu0 0.0
    %457 = vmatpush1.msra.mxu0 0.0
    %458 = vmatprep.subr.mxu0 0.0
    %459 = vmatpush1.msra.mxu0 0.0
    %460 = vmatprep.subr.mxu0 0.0
    %461 = vmatpush1.msra.mxu0 0.0
    %462 = vmatprep.subr.mxu0 0.0
    %463 = vmatpush1.msra.mxu0 0.0
    %464 = vmatprep.subr.mxu0 0.0
    %465 = vmatpush1.msra.mxu0 0.0
    %466 = vmatprep.subr.mxu0 0.0
    %467 = vmatpush1.msra.mxu0 0.0
    %468 = vmatprep.subr.mxu0 0.0
    %469 = vmatpush1.msra.mxu0 0.0
    %470 = vmatprep.subr.mxu0 0.0
    %471 = vmatpush1.msra.mxu0 0.0
    %472 = vmatprep.subr.mxu0 0.0
    %473 = vmatpush1.msra.mxu0 0.0
    %474 = vmatprep.subr.mxu0 0.0
    %475 = vmatpush1.msra.mxu0 0.0
    %476 = vmatprep.subr.mxu0 0.0
    %477 = vmatpush1.msra.mxu0 0.0
    %478 = vmatprep.subr.mxu0 0.0
    %479 = vmatpush1.msra.mxu0 0.0
    %480 = vmatprep.subr.mxu0 0.0
    %481 = vmatpush1.msra.mxu0 0.0
    %482 = vmatprep.subr.mxu0 0.0
    %483 = vmatpush1.msra.mxu0 0.0
    %484 = vmatprep.subr.mxu0 0.0
    %485 = vmatpush1.msra.mxu0 0.0
    %486 = vmatprep.subr.mxu0 0.0
    %487 = vmatpush1.msra.mxu0 0.0
    %488 = vmatprep.subr.mxu0 0.0
    %489 = vmatpush1.msra.mxu0 0.0
    %490 = vmatprep.subr.mxu0 0.0
    %491 = vmatpush1.msra.mxu0 0.0
    %492 = vmatprep.subr.mxu0 0.0
    %493 = vmatpush1.msra.mxu0 0.0
    %494 = vmatprep.subr.mxu0 0.0
    %495 = vmatpush1.msra.mxu0 0.0
    %496 = vmatprep.subr.mxu0 0.0
    %497 = vmatpush1.msra.mxu0 0.0
    %498 = vmatprep.subr.mxu0 0.0
    %499 = vmatpush1.msra.mxu0 0.0
    %500 = vmatprep.mubr.f32.mxu0 0.0
    %501 = vmatmul.mubr.f32.gmra.mrb[0].mxu0 %v434
    %v502 = vpop.f32.mrb[0].mxu0
    %v503 = vadd.f32 %v431, %v502
    %v504 = vpop.f32.mrb[0].mxu0
    %505 = vdwg.mxu0
    %vm506 = vcmask 64512
    %v507 = vsel %vm506, %v503, -inf
    %v508 = vrot.slane %v507, 4
    %v509 = vmax.f32 %v507, %v508
    %v510 = vrot.slane %v509, 2
    %v511 = vmax.f32 %v509, %v510
    %v512 = vrot.slane %v511, 1
    %v513 = vmax.f32 %v511, %v512
    %v514 = vsub.f32 %v503, %v513
    %v515 = vmul.f32 %v514, 1.442695
    %v516 = vpow.pop %v515
    %v517 = vsel %vm506, %v516, 0.0
    %v518 = vrot.slane %v517, 4
    %v519 = vadd.f32 %v517, %v518
    %v520 = vrot.slane %v519, 2
    %v521 = vadd.f32 %v519, %v520
    %v522 = vrot.slane %v521, 1
    %v523 = vadd.f32 %v521, %v522
    %v524 = vrcp.pop %v523
    %v525 = vmul.f32 %v516, %v524
    %526 = vst.msk [vmem:[#allocation2] sm:$0xff] %vm506, %v525
    // Predicated region
    $region38: #{tpu_custom_call.1} parent=1 // pred_check
      _
    $region39: #{tpu_custom_call.1} parent=1 // pred_check_branch
      %528 = sbr.rel (0) target = $region41
    $region40: #{tpu_custom_call.1} parent=1 // pred_region
      %s530 = ssub.s32 128, 128
      %531 = vsyncadd [#allocation3], %s530
      %s533 = sshll.u32 [#allocation2], 4
      %s534 = int_to_ptr.vmem [resolvable:$true] %s533
      %536 = dma.vmem_to_hbm [thread:$0]  %s534, 128, %s9, [#allocation3]
    $region41: #{tpu_custom_call.1} parent=1 // pred_fallthru
      _
    // Predicated region
    $region42: #{tpu_custom_call.1} parent=1 // pred_check
      _
    $region43: #{tpu_custom_call.1} parent=1 // pred_check_branch
      %538 = sbr.rel (0) target = $region45
    $region44: #{tpu_custom_call.1} parent=1 // pred_region
      %539 = dma.done [#allocation3], 128
    $region45: #{tpu_custom_call.1} parent=1 // pred_fallthru
      _
    %540 = vsyncpa [#allocation3], 1

</llo_original>
